<compile_context>
chip_gen: v7x
topology: tpu7x:2x2x1
jax: 0.10.0
libtpu: 0.0.40
codegen_flags: <defaults>
</compile_context>

<pallas_src>
import functools

import jax
import jax.numpy as jnp
from jax.experimental import pallas as pl
from jax.experimental.pallas import tpu as pltpu


def _round_up(n: int, m: int) -> int:
    return ((n + m - 1) // m) * m


_SMALL_K = 8  # contraction dims at/below this use VPU rank-1 updates, not MXU


def _fused_mlp_kernel(*refs, n_layers: int):
    """Fused MLP: [Linear -> Tanh] * (n_layers-1) -> Linear in one body.

    refs = (x_ref, w1_ref, b1_ref, ..., wN_ref, bN_ref, out_ref), all VMEM,
    all UNPADDED on the feature axes (full-extent blocks):
      x_ref : [tm, D0]
      wi_ref: [D(i-1), Di]   (y = x @ W layout == torch weight transposed)
      bi_ref: [1, Di]
      out   : [tm, DN]
    Intermediate activations never leave VMEM/vregs.
    """
    x_ref = refs[0]
    out_ref = refs[1 + 2 * n_layers]
    h = x_ref[...]
    for i in range(n_layers):
        w_ref = refs[1 + 2 * i]
        b_ref = refs[2 + 2 * i]
        k_dim = w_ref.shape[0]
        if k_dim <= _SMALL_K:
            # Tiny contraction (data_dim=2): a K=2 MXU matmul is ~all wasted
            # columns — do rank-1 VPU updates instead.
            w = w_ref[...]
            acc = h[:, 0:1] * w[0:1, :]
            for k in range(1, k_dim):
                acc = acc + h[:, k:k + 1] * w[k:k + 1, :]
            h = acc + b_ref[...]
        else:
            # MXU matmul with f32 accumulation; bias added once (1-row bcast).
            # TODO(synk): bf16 dot operands on v6e/v7x when dims grow.
            h = jnp.dot(h, w_ref[...], preferred_element_type=jnp.float32)
            h = h + b_ref[...]
        if i < n_layers - 1:
            h = jnp.tanh(h)  # EUP transcendental, kept in f32 (v5e-safe)
    out_ref[...] = h.astype(out_ref.dtype)


def fused_mlp_forward(x, params):
    """Pallas equivalent of MLP.forward: flatten, then fused Linear/Tanh chain.

    x      : [B, ...]; flattened row-major like torch's x.view(B, -1).
    params : list of (W [in, out], b [1, out]) f32. W is the torch weight
             transposed and the bias is stored 2-D at init, so this jitted
             forward contains no per-call padding / scatter ops.
    """
    B = x.shape[0]
    h = x.reshape(B, -1).astype(jnp.float32)
    d_in = h.shape[1]
    n_layers = len(params)
    d_out = params[-1][0].shape[1]

    # ---- batch tiling (sublane axis only; no lane padding anywhere) --------
    b_pad8 = _round_up(max(B, 8), 8)
    # One grid step unless the batch is big enough that a 2-way megacore split
    # (v7x) pays for the extra ~0.35 us per grid step.
    tm = 256 if b_pad8 >= 512 else b_pad8
    b_pad = _round_up(b_pad8, tm)
    if b_pad != B:
        h = jnp.pad(h, ((0, b_pad - B), (0, 0)))
    n_tiles = b_pad // tm

    # ---- specs: x tiled over batch; weights/biases whole-resident ----------
    in_specs = [pl.BlockSpec((tm, d_in), lambda i: (i, 0))]
    flat_inputs = [h]
    for w, b in params:
        in_specs.append(pl.BlockSpec(w.shape, lambda i: (0, 0)))  # whole W
        in_specs.append(pl.BlockSpec(b.shape, lambda i: (0, 0)))  # 1-row bias
        flat_inputs.extend([w, b])

    # ---- advisory cost estimate on the real (unpadded) dims ----------------
    flops = 0
    transcendentals = 0
    bytes_accessed = b_pad * d_in * 4
    for i, (w, b) in enumerate(params):
        flops += 2 * b_pad * w.shape[0] * w.shape[1]
        bytes_accessed += (w.size + b.size) * 4
        if i < n_layers - 1:
            transcendentals += b_pad * w.shape[1]
    bytes_accessed += b_pad * d_out * 4

    out_p = pl.pallas_call(
        functools.partial(_fused_mlp_kernel, n_layers=n_layers),
        out_shape=jax.ShapeDtypeStruct((b_pad, d_out), jnp.float32),
        grid=(n_tiles,),
        in_specs=in_specs,
        out_specs=pl.BlockSpec((tm, d_out), lambda i: (i, 0)),
        compiler_params=pltpu.CompilerParams(
            dimension_semantics=("parallel",)),  # megacore sharding when split
        cost_estimate=pl.CostEstimate(
            flops=flops,
            transcendentals=transcendentals,
            bytes_accessed=bytes_accessed),
    )(*flat_inputs)

    return out_p[:B]


def init_mlp_params(key, layer_sizes):
    """Deterministic init matching nn.Linear shapes.

    W stored as [in, out] (torch weight transposed); b stored as [1, out] so
    the per-call forward never reshapes/pads parameters.
    """
    params = []
    for i in range(len(layer_sizes) - 1):
        fan_in, fan_out = layer_sizes[i], layer_sizes[i + 1]
        key, kw, kb = jax.random.split(key, 3)
        bound = 1.0 / (fan_in ** 0.5)
        w = jax.random.uniform(kw, (fan_in, fan_out), jnp.float32, -bound, bound)
        b = jax.random.uniform(kb, (1, fan_out), jnp.float32, -bound, bound)
        params.append((w, b))
    return params


def free_mlp_generator_forward(z, t, params):
    """FreeMLPGenerator.forward(z, t): t is ignored; returns mlp(z)."""
    del t  # unused, as in the PyTorch module
    return fused_mlp_forward(z, params)


if __name__ == "__main__":
    key = jax.random.PRNGKey(0)
    key, kz, kt = jax.random.split(key, 3)

    # cfg: data_dim=2, hidden_dim=64, batch_size=128  ->  MLP [2, 64, 2].
    batch, data_dim, hidden_dim = 128, 2, 64
    layer_sizes = [data_dim, hidden_dim, 2]

    z = jax.random.normal(kz, (batch, data_dim), dtype=jnp.float32)
    t = jax.random.uniform(kt, (batch, 1), dtype=jnp.float32)  # unused

    params = init_mlp_params(key, layer_sizes)

    fwd = jax.jit(free_mlp_generator_forward)
    out = fwd(z, t, params)
    out = jax.block_until_ready(out)

    # Pure-JAX reference (same math, no Pallas).
    h_ref = z.reshape(batch, -1)
    for i, (w, b) in enumerate(params):
        h_ref = h_ref @ w + b
        if i < len(params) - 1:
            h_ref = jnp.tanh(h_ref)

    assert out.shape == (batch, 2), out.shape
    assert jnp.allclose(out, h_ref, atol=1e-5, rtol=1e-5)

    print("KERNEL_OK")
</pallas_src>

<mosaic_0001>
module attributes {stable_mosaic.version = 11 : i64} {
  func.func @_fused_mlp_kernel(%arg0: i32, %arg1: memref<128x2xf32, #tpu.memory_space<vmem>>, %arg2: memref<2x64xf32, #tpu.memory_space<vmem>>, %arg3: memref<1x64xf32, #tpu.memory_space<vmem>>, %arg4: memref<64x2xf32, #tpu.memory_space<vmem>>, %arg5: memref<1x2xf32, #tpu.memory_space<vmem>>, %arg6: memref<128x2xf32, #tpu.memory_space<vmem>>) attributes {dimension_semantics = [#tpu.dimension_semantics<parallel>], iteration_bounds = array<i64: 1>, scalar_prefetch = 0 : i64, scratch_operands = 0 : i64, tpu.core_type = #tpu.core_type<tc>, window_params = [{transform_indices = @transform_0, window_bounds = array<i64: 128, 2>}, {pipeline_mode = #tpu.pipeline_mode<synchronous>, transform_indices = @transform_1, window_bounds = array<i64: 2, 64>}, {pipeline_mode = #tpu.pipeline_mode<synchronous>, transform_indices = @transform_2, window_bounds = array<i64: 1, 64>}, {pipeline_mode = #tpu.pipeline_mode<synchronous>, transform_indices = @transform_3, window_bounds = array<i64: 64, 2>}, {pipeline_mode = #tpu.pipeline_mode<synchronous>, transform_indices = @transform_4, window_bounds = array<i64: 1, 2>}, {transform_indices = @transform_5, window_bounds = array<i64: 128, 2>}]} {
    %c0 = arith.constant 0 : index
    %c0_0 = arith.constant 0 : index
    %0 = vector.load %arg1[%c0, %c0_0] : memref<128x2xf32, #tpu.memory_space<vmem>>, vector<128x2xf32>
    %c0_1 = arith.constant 0 : index
    %c0_2 = arith.constant 0 : index
    %1 = vector.load %arg2[%c0_1, %c0_2] : memref<2x64xf32, #tpu.memory_space<vmem>>, vector<2x64xf32>
    %2 = vector.extract_strided_slice %0 {offsets = [0, 0], sizes = [128, 1], strides = [1, 1]} : vector<128x2xf32> to vector<128x1xf32>
    %3 = vector.extract_strided_slice %1 {offsets = [0, 0], sizes = [1, 64], strides = [1, 1]} : vector<2x64xf32> to vector<1x64xf32>
    %4 = vector.broadcast %2 : vector<128x1xf32> to vector<128x64xf32>
    %5 = vector.broadcast %3 : vector<1x64xf32> to vector<128x64xf32>
    %6 = arith.mulf %4, %5 : vector<128x64xf32>
    %7 = vector.extract_strided_slice %0 {offsets = [0, 1], sizes = [128, 1], strides = [1, 1]} : vector<128x2xf32> to vector<128x1xf32>
    %8 = vector.extract_strided_slice %1 {offsets = [1, 0], sizes = [1, 64], strides = [1, 1]} : vector<2x64xf32> to vector<1x64xf32>
    %9 = vector.broadcast %7 : vector<128x1xf32> to vector<128x64xf32>
    %10 = vector.broadcast %8 : vector<1x64xf32> to vector<128x64xf32>
    %11 = arith.mulf %9, %10 : vector<128x64xf32>
    %12 = arith.addf %6, %11 : vector<128x64xf32>
    %c0_3 = arith.constant 0 : index
    %c0_4 = arith.constant 0 : index
    %13 = vector.load %arg3[%c0_3, %c0_4] : memref<1x64xf32, #tpu.memory_space<vmem>>, vector<1x64xf32>
    %14 = vector.broadcast %13 : vector<1x64xf32> to vector<128x64xf32>
    %15 = arith.addf %12, %14 : vector<128x64xf32>
    %16 = math.tanh %15 : vector<128x64xf32>
    %c0_5 = arith.constant 0 : index
    %c0_6 = arith.constant 0 : index
    %17 = vector.load %arg4[%c0_5, %c0_6] : memref<64x2xf32, #tpu.memory_space<vmem>>, vector<64x2xf32>
    %cst = arith.constant dense<0.000000e+00> : vector<128x2xf32>
    %18 = tpu.matmul %16, %17, %cst {dimension_numbers = #tpu.dot_dimension_numbers<[1], [0], [0], [1], [0, 0, 1, 1], [], []>} : vector<128x64xf32>, vector<64x2xf32>, vector<128x2xf32> -> vector<128x2xf32>
    %c0_7 = arith.constant 0 : index
    %c0_8 = arith.constant 0 : index
    %19 = vector.load %arg5[%c0_7, %c0_8] : memref<1x2xf32, #tpu.memory_space<vmem>>, vector<1x2xf32>
    %20 = vector.broadcast %19 : vector<1x2xf32> to vector<128x2xf32>
    %21 = arith.addf %18, %20 : vector<128x2xf32>
    %c0_9 = arith.constant 0 : index
    %c0_10 = arith.constant 0 : index
    %22 = vector.load %arg6[%c0_9, %c0_10] : memref<128x2xf32, #tpu.memory_space<vmem>>, vector<128x2xf32>
    tpu.vector_store %arg6[%c0_9, %c0_10], %21 {strides = array<i32>} : memref<128x2xf32, #tpu.memory_space<vmem>>, vector<128x2xf32>,
    return
  }
  func.func @transform_0(%arg0: i32) -> (i32, i32) {
    %c0_i32 = arith.constant 0 : i32
    %c0_i32_0 = arith.constant 0 : i32
    return %arg0, %c0_i32 : i32, i32
  }
  func.func @transform_1(%arg0: i32) -> (i32, i32) {
    %c0_i32 = arith.constant 0 : i32
    %c0_i32_0 = arith.constant 0 : i32
    %c0_i32_1 = arith.constant 0 : i32
    return %c0_i32, %c0_i32_0 : i32, i32
  }
  func.func @transform_2(%arg0: i32) -> (i32, i32) {
    %c0_i32 = arith.constant 0 : i32
    %c0_i32_0 = arith.constant 0 : i32
    %c0_i32_1 = arith.constant 0 : i32
    return %c0_i32, %c0_i32_0 : i32, i32
  }
  func.func @transform_3(%arg0: i32) -> (i32, i32) {
    %c0_i32 = arith.constant 0 : i32
    %c0_i32_0 = arith.constant 0 : i32
    %c0_i32_1 = arith.constant 0 : i32
    return %c0_i32, %c0_i32_0 : i32, i32
  }
  func.func @transform_4(%arg0: i32) -> (i32, i32) {
    %c0_i32 = arith.constant 0 : i32
    %c0_i32_0 = arith.constant 0 : i32
    %c0_i32_1 = arith.constant 0 : i32
    return %c0_i32, %c0_i32_0 : i32, i32
  }
  func.func @transform_5(%arg0: i32) -> (i32, i32) {
    %c0_i32 = arith.constant 0 : i32
    %c0_i32_0 = arith.constant 0 : i32
    return %arg0, %c0_i32 : i32, i32
  }
}

</mosaic_0001>

<llo_original>
// kernel: free_mlp_generator_forward.1
$region0: #{free_mlp_generator_forward.1}
  #allocation0 [shape = 'u32[]', space=smem, size = 0x4, offset = 0x4, fixed_abs, tag = 'smem constant byte address 0x4 - core index']
  #allocation1 [shape = 'u32[144,128]{1,0:T(1,128)}', space=vmem, size = 0x12000, scoped, tag = 'internal scratch']
  %s0 = inlined_call_operand.vmem [shape: f32[128,2], index: 0, kind: input, shape index: {}]
  %s1 = inlined_call_operand.vmem [shape: f32[2,64], index: 1, kind: input, shape index: {}]
  %s2 = inlined_call_operand.vmem [shape: f32[1,64], index: 2, kind: input, shape index: {}]
  %s3 = inlined_call_operand.vmem [shape: f32[64,2], index: 3, kind: input, shape index: {}]
  %s4 = inlined_call_operand.vmem [shape: f32[1,2], index: 4, kind: input, shape index: {}]
  %s5 = inlined_call_operand.vmem [shape: f32[128,2], index: 5, kind: output, shape index: {}]
  %s6 = sld [smem:[#allocation0]]
  $region30: #{free_mlp_generator_forward.1} parent=0
    _
  %s8 = ssub.s32 1, %s6
  %s9 = scalar_select 0, %s8, %s6
  // Predicated region
  $region2: #{free_mlp_generator_forward.1} parent=0 // pred_check
    _
  $region3: #{free_mlp_generator_forward.1} parent=0 // pred_check_branch
    %11 = sbr.rel (0) target = $region5
  $region4: #{free_mlp_generator_forward.1} parent=0 // pred_region
    _
  $region5: #{free_mlp_generator_forward.1} parent=0 // pred_fallthru
    _
  // Predicated region
  $region6: #{free_mlp_generator_forward.1} parent=0 // pred_check
    _
  $region7: #{free_mlp_generator_forward.1} parent=0 // pred_check_branch
    %13 = sbr.rel (0) target = $region9
  $region8: #{free_mlp_generator_forward.1} parent=0 // pred_region
    _
  $region9: #{free_mlp_generator_forward.1} parent=0 // pred_fallthru
    _
  // Predicated region
  $region10: #{free_mlp_generator_forward.1} parent=0 // pred_check
    _
  $region11: #{free_mlp_generator_forward.1} parent=0 // pred_check_branch
    %15 = sbr.rel (0) target = $region13
  $region12: #{free_mlp_generator_forward.1} parent=0 // pred_region
    _
  $region13: #{free_mlp_generator_forward.1} parent=0 // pred_fallthru
    _
  // Predicated region
  $region14: #{free_mlp_generator_forward.1} parent=0 // pred_check
    _
  $region15: #{free_mlp_generator_forward.1} parent=0 // pred_check_branch
    %17 = sbr.rel (0) target = $region17
  $region16: #{free_mlp_generator_forward.1} parent=0 // pred_region
    _
  $region17: #{free_mlp_generator_forward.1} parent=0 // pred_fallthru
    _
  // Predicated region
  $region18: #{free_mlp_generator_forward.1} parent=0 // pred_check
    _
  $region19: #{free_mlp_generator_forward.1} parent=0 // pred_check_branch
    %19 = sbr.rel (0) target = $region21
  $region20: #{free_mlp_generator_forward.1} parent=0 // pred_region
    _
  $region21: #{free_mlp_generator_forward.1} parent=0 // pred_fallthru
    _
  %v20 = vld [vmem:[%s0] sm:$0xff]
  %v21 = vld [vmem:[%s0 + $0x8] sm:$0xff]
  %v22 = vld [vmem:[%s0 + $0x10] sm:$0xff]
  %v23 = vld [vmem:[%s0 + $0x18] sm:$0xff]
  %v24 = vld [vmem:[%s0 + $0x20] sm:$0xff]
  %v25 = vld [vmem:[%s0 + $0x28] sm:$0xff]
  %v26 = vld [vmem:[%s0 + $0x30] sm:$0xff]
  %v27 = vld [vmem:[%s0 + $0x38] sm:$0xff]
  %v28 = vld [vmem:[%s0 + $0x40] sm:$0xff]
  %v29 = vld [vmem:[%s0 + $0x48] sm:$0xff]
  %v30 = vld [vmem:[%s0 + $0x50] sm:$0xff]
  %v31 = vld [vmem:[%s0 + $0x58] sm:$0xff]
  %v32 = vld [vmem:[%s0 + $0x60] sm:$0xff]
  %v33 = vld [vmem:[%s0 + $0x68] sm:$0xff]
  %v34 = vld [vmem:[%s0 + $0x70] sm:$0xff]
  %v35 = vld [vmem:[%s0 + $0x78] sm:$0xff]
  %v36 = vld [vmem:[%s1] sm:$0x3]
  %38 = vset.pattern.permute.xlu0 0
  %39 = vperm.xlu0 %38, %v20
  %v40 = vpop.permute.xlu0 %39
  %43 = vset.pattern.permute.xlu0 0
  %44 = vperm.xlu0 %43, %v21
  %v45 = vpop.permute.xlu0 %44
  %48 = vset.pattern.permute.xlu0 0
  %49 = vperm.xlu0 %48, %v22
  %v50 = vpop.permute.xlu0 %49
  %53 = vset.pattern.permute.xlu0 0
  %54 = vperm.xlu0 %53, %v23
  %v55 = vpop.permute.xlu0 %54
  %58 = vset.pattern.permute.xlu0 0
  %59 = vperm.xlu0 %58, %v24
  %v60 = vpop.permute.xlu0 %59
  %63 = vset.pattern.permute.xlu0 0
  %64 = vperm.xlu0 %63, %v25
  %v65 = vpop.permute.xlu0 %64
  %68 = vset.pattern.permute.xlu0 0
  %69 = vperm.xlu0 %68, %v26
  %v70 = vpop.permute.xlu0 %69
  %73 = vset.pattern.permute.xlu0 0
  %74 = vperm.xlu0 %73, %v27
  %v75 = vpop.permute.xlu0 %74
  %78 = vset.pattern.permute.xlu0 0
  %79 = vperm.xlu0 %78, %v28
  %v80 = vpop.permute.xlu0 %79
  %83 = vset.pattern.permute.xlu0 0
  %84 = vperm.xlu0 %83, %v29
  %v85 = vpop.permute.xlu0 %84
  %88 = vset.pattern.permute.xlu0 0
  %89 = vperm.xlu0 %88, %v30
  %v90 = vpop.permute.xlu0 %89
  %93 = vset.pattern.permute.xlu0 0
  %94 = vperm.xlu0 %93, %v31
  %v95 = vpop.permute.xlu0 %94
  %98 = vset.pattern.permute.xlu0 0
  %99 = vperm.xlu0 %98, %v32
  %v100 = vpop.permute.xlu0 %99
  %103 = vset.pattern.permute.xlu0 0
  %104 = vperm.xlu0 %103, %v33
  %v105 = vpop.permute.xlu0 %104
  %108 = vset.pattern.permute.xlu0 0
  %109 = vperm.xlu0 %108, %v34
  %v110 = vpop.permute.xlu0 %109
  %113 = vset.pattern.permute.xlu0 0
  %114 = vperm.xlu0 %113, %v35
  %v115 = vpop.permute.xlu0 %114
  %v117 = vlaneseq
  %v118 = vshrl.u32 %v117, 7
  %v119 = vsub.s32 0, %v118
  %v120 = vrot.slane %v36, %v119
  %v121 = vmul.f32 %v40, %v120
  %v122 = vmul.f32 %v45, %v120
  %v123 = vmul.f32 %v50, %v120
  %v124 = vmul.f32 %v55, %v120
  %v125 = vmul.f32 %v60, %v120
  %v126 = vmul.f32 %v65, %v120
  %v127 = vmul.f32 %v70, %v120
  %v128 = vmul.f32 %v75, %v120
  %v129 = vmul.f32 %v80, %v120
  %v130 = vmul.f32 %v85, %v120
  %v131 = vmul.f32 %v90, %v120
  %v132 = vmul.f32 %v95, %v120
  %v133 = vmul.f32 %v100, %v120
  %v134 = vmul.f32 %v105, %v120
  %v135 = vmul.f32 %v110, %v120
  %v136 = vmul.f32 %v115, %v120
  %137 = vset.pattern.permute.xlu0 1
  %138 = vperm.xlu0 %137, %v20
  %v139 = vpop.permute.xlu0 %138
  %141 = vset.pattern.permute.xlu0 1
  %142 = vperm.xlu0 %141, %v21
  %v143 = vpop.permute.xlu0 %142
  %145 = vset.pattern.permute.xlu0 1
  %146 = vperm.xlu0 %145, %v22
  %v147 = vpop.permute.xlu0 %146
  %149 = vset.pattern.permute.xlu0 1
  %150 = vperm.xlu0 %149, %v23
  %v151 = vpop.permute.xlu0 %150
  %153 = vset.pattern.permute.xlu0 1
  %154 = vperm.xlu0 %153, %v24
  %v155 = vpop.permute.xlu0 %154
  %157 = vset.pattern.permute.xlu0 1
  %158 = vperm.xlu0 %157, %v25
  %v159 = vpop.permute.xlu0 %158
  %161 = vset.pattern.permute.xlu0 1
  %162 = vperm.xlu0 %161, %v26
  %v163 = vpop.permute.xlu0 %162
  %165 = vset.pattern.permute.xlu0 1
  %166 = vperm.xlu0 %165, %v27
  %v167 = vpop.permute.xlu0 %166
  %169 = vset.pattern.permute.xlu0 1
  %170 = vperm.xlu0 %169, %v28
  %v171 = vpop.permute.xlu0 %170
  %173 = vset.pattern.permute.xlu0 1
  %174 = vperm.xlu0 %173, %v29
  %v175 = vpop.permute.xlu0 %174
  %177 = vset.pattern.permute.xlu0 1
  %178 = vperm.xlu0 %177, %v30
  %v179 = vpop.permute.xlu0 %178
  %181 = vset.pattern.permute.xlu0 1
  %182 = vperm.xlu0 %181, %v31
  %v183 = vpop.permute.xlu0 %182
  %185 = vset.pattern.permute.xlu0 1
  %186 = vperm.xlu0 %185, %v32
  %v187 = vpop.permute.xlu0 %186
  %189 = vset.pattern.permute.xlu0 1
  %190 = vperm.xlu0 %189, %v33
  %v191 = vpop.permute.xlu0 %190
  %193 = vset.pattern.permute.xlu0 1
  %194 = vperm.xlu0 %193, %v34
  %v195 = vpop.permute.xlu0 %194
  %197 = vset.pattern.permute.xlu0 1
  %198 = vperm.xlu0 %197, %v35
  %v199 = vpop.permute.xlu0 %198
  %v201 = vlaneseq
  %v202 = vshrl.u32 %v201, 7
  %v203 = vsub.s32 1, %v202
  %v204 = vrot.slane %v36, %v203
  %v205 = vmul.f32 %v139, %v204
  %v206 = vmul.f32 %v143, %v204
  %v207 = vmul.f32 %v147, %v204
  %v208 = vmul.f32 %v151, %v204
  %v209 = vmul.f32 %v155, %v204
  %v210 = vmul.f32 %v159, %v204
  %v211 = vmul.f32 %v163, %v204
  %v212 = vmul.f32 %v167, %v204
  %v213 = vmul.f32 %v171, %v204
  %v214 = vmul.f32 %v175, %v204
  %v215 = vmul.f32 %v179, %v204
  %v216 = vmul.f32 %v183, %v204
  %v217 = vmul.f32 %v187, %v204
  %v218 = vmul.f32 %v191, %v204
  %v219 = vmul.f32 %v195, %v204
  %v220 = vmul.f32 %v199, %v204
  %v221 = vadd.f32 %v121, %v205
  %v222 = vadd.f32 %v122, %v206
  %v223 = vadd.f32 %v123, %v207
  %v224 = vadd.f32 %v124, %v208
  %v225 = vadd.f32 %v125, %v209
  %v226 = vadd.f32 %v126, %v210
  %v227 = vadd.f32 %v127, %v211
  %v228 = vadd.f32 %v128, %v212
  %v229 = vadd.f32 %v129, %v213
  %v230 = vadd.f32 %v130, %v214
  %v231 = vadd.f32 %v131, %v215
  %v232 = vadd.f32 %v132, %v216
  %v233 = vadd.f32 %v133, %v217
  %v234 = vadd.f32 %v134, %v218
  %v235 = vadd.f32 %v135, %v219
  %v236 = vadd.f32 %v136, %v220
  %v237 = vld [vmem:[%s2] sm:$0x1]
  %v239 = vlaneseq
  %v240 = vshrl.u32 %v239, 7
  %v241 = vsub.s32 0, %v240
  %v242 = vrot.slane %v237, %v241
  %v244 = vadd.f32 %v221, %v242
  %v245 = vadd.f32 %v222, %v242
  %v246 = vadd.f32 %v223, %v242
  %v247 = vadd.f32 %v224, %v242
  %v248 = vadd.f32 %v225, %v242
  %v249 = vadd.f32 %v226, %v242
  %v250 = vadd.f32 %v227, %v242
  %v251 = vadd.f32 %v228, %v242
  %v252 = vadd.f32 %v229, %v242
  %v253 = vadd.f32 %v230, %v242
  %v254 = vadd.f32 %v231, %v242
  %v255 = vadd.f32 %v232, %v242
  %v256 = vadd.f32 %v233, %v242
  %v257 = vadd.f32 %v234, %v242
  %v258 = vadd.f32 %v235, %v242
  %v259 = vadd.f32 %v236, %v242
  %v260 = vtanh.pop %v244
  %v261 = vtanh.pop %v245
  %v262 = vtanh.pop %v246
  %v263 = vtanh.pop %v247
  %v264 = vtanh.pop %v248
  %v265 = vtanh.pop %v249
  %v266 = vtanh.pop %v250
  %v267 = vtanh.pop %v251
  %v268 = vtanh.pop %v252
  %v269 = vtanh.pop %v253
  %v270 = vtanh.pop %v254
  %v271 = vtanh.pop %v255
  %v272 = vtanh.pop %v256
  %v273 = vtanh.pop %v257
  %v274 = vtanh.pop %v258
  %v275 = vtanh.pop %v259
  %v276 = vld [vmem:[%s3] sm:$0xff]
  %v277 = vld [vmem:[%s3 + $0x8] sm:$0xff]
  %v278 = vld [vmem:[%s3 + $0x10] sm:$0xff]
  %v279 = vld [vmem:[%s3 + $0x18] sm:$0xff]
  %v280 = vld [vmem:[%s3 + $0x20] sm:$0xff]
  %v281 = vld [vmem:[%s3 + $0x28] sm:$0xff]
  %v282 = vld [vmem:[%s3 + $0x30] sm:$0xff]
  %v283 = vld [vmem:[%s3 + $0x38] sm:$0xff]
  %v284 = vld [vmem:[%s4] sm:$0x1]
  %v286 = vlaneseq
  %v287 = vshrl.u32 %v286, 7
  %v288 = vsub.s32 0, %v287
  %v289 = vrot.slane %v284, %v288
  %vm291 = vcmask 523264
  %v293 = vsel %vm291, %v260, 0
  %v296 = vsel %vm291, %v261, 0
  %v299 = vsel %vm291, %v262, 0
  %v302 = vsel %vm291, %v263, 0
  %v305 = vsel %vm291, %v264, 0
  %v308 = vsel %vm291, %v265, 0
  %v311 = vsel %vm291, %v266, 0
  %v314 = vsel %vm291, %v267, 0
  %v317 = vsel %vm291, %v268, 0
  %v320 = vsel %vm291, %v269, 0
  %v323 = vsel %vm291, %v270, 0
  %v326 = vsel %vm291, %v271, 0
  %v329 = vsel %vm291, %v272, 0
  %v332 = vsel %vm291, %v273, 0
  %v335 = vsel %vm291, %v274, 0
  %v338 = vsel %vm291, %v275, 0
  %340 = vmatprep.subr.mxu0 0.0
  %341 = vmatpush1.msra.mxu0 %v276
  %342 = vmatprep.subr.mxu0 0.0
  %343 = vmatpush1.msra.mxu0 %v277
  %344 = vmatprep.subr.mxu0 0.0
  %345 = vmatpush1.msra.mxu0 %v278
  %346 = vmatprep.subr.mxu0 0.0
  %347 = vmatpush1.msra.mxu0 %v279
  %348 = vmatprep.subr.mxu0 0.0
  %349 = vmatpush1.msra.mxu0 %v280
  %350 = vmatprep.subr.mxu0 0.0
  %351 = vmatpush1.msra.mxu0 %v281
  %352 = vmatprep.subr.mxu0 0.0
  %353 = vmatpush1.msra.mxu0 %v282
  %354 = vmatprep.subr.mxu0 0.0
  %355 = vmatpush1.msra.mxu0 %v283
  %356 = vmatprep.subr.mxu0 0.0
  %357 = vmatpush1.msra.mxu0 0.0
  %358 = vmatprep.subr.mxu0 0.0
  %359 = vmatpush1.msra.mxu0 0.0
  %360 = vmatprep.subr.mxu0 0.0
  %361 = vmatpush1.msra.mxu0 0.0
  %362 = vmatprep.subr.mxu0 0.0
  %363 = vmatpush1.msra.mxu0 0.0
  %364 = vmatprep.subr.mxu0 0.0
  %365 = vmatpush1.msra.mxu0 0.0
  %366 = vmatprep.subr.mxu0 0.0
  %367 = vmatpush1.msra.mxu0 0.0
  %368 = vmatprep.subr.mxu0 0.0
  %369 = vmatpush1.msra.mxu0 0.0
  %370 = vmatprep.subr.mxu0 0.0
  %371 = vmatpush1.msra.mxu0 0.0
  %372 = vmatprep.subr.mxu0 0.0
  %373 = vmatpush1.msra.mxu0 0.0
  %374 = vmatprep.subr.mxu0 0.0
  %375 = vmatpush1.msra.mxu0 0.0
  %376 = vmatprep.subr.mxu0 0.0
  %377 = vmatpush1.msra.mxu0 0.0
  %378 = vmatprep.subr.mxu0 0.0
  %379 = vmatpush1.msra.mxu0 0.0
  %380 = vmatprep.subr.mxu0 0.0
  %381 = vmatpush1.msra.mxu0 0.0
  %382 = vmatprep.subr.mxu0 0.0
  %383 = vmatpush1.msra.mxu0 0.0
  %384 = vmatprep.subr.mxu0 0.0
  %385 = vmatpush1.msra.mxu0 0.0
  %386 = vmatprep.subr.mxu0 0.0
  %387 = vmatpush1.msra.mxu0 0.0
  %388 = vmatprep.subr.mxu0 0.0
  %389 = vmatpush1.msra.mxu0 0.0
  %390 = vmatprep.subr.mxu0 0.0
  %391 = vmatpush1.msra.mxu0 0.0
  %392 = vmatprep.subr.mxu0 0.0
  %393 = vmatpush1.msra.mxu0 0.0
  %394 = vmatprep.subr.mxu0 0.0
  %395 = vmatpush1.msra.mxu0 0.0
  %396 = vmatprep.subr.mxu0 0.0
  %397 = vmatpush1.msra.mxu0 0.0
  %398 = vmatprep.subr.mxu0 0.0
  %399 = vmatpush1.msra.mxu0 0.0
  %400 = vmatprep.subr.mxu0 0.0
  %401 = vmatpush1.msra.mxu0 0.0
  %402 = vmatprep.subr.mxu0 0.0
  %403 = vmatpush1.msra.mxu0 0.0
  %404 = vmatprep.mubr.f32.mxu0 0.0
  %405 = vmatmul.mubr.f32.gmra.mrb[0].mxu0 %v293
  %v406 = vpop.f32.mrb[0].mxu0
  %v407 = vadd.f32 %v289, %v406
  %v408 = vpop.f32.mrb[0].mxu0
  %409 = vmatprep.mubr.f32.mxu0 0.0
  %410 = vmatmul.mubr.f32.gmra.mrb[0].mxu0 %v296
  %v411 = vpop.f32.mrb[0].mxu0
  %v412 = vadd.f32 %v289, %v411
  %v413 = vpop.f32.mrb[0].mxu0
  %414 = vmatprep.mubr.f32.mxu0 0.0
  %415 = vmatmul.mubr.f32.gmra.mrb[0].mxu0 %v299
  %v416 = vpop.f32.mrb[0].mxu0
  %v417 = vadd.f32 %v289, %v416
  %v418 = vpop.f32.mrb[0].mxu0
  %419 = vmatprep.mubr.f32.mxu0 0.0
  %420 = vmatmul.mubr.f32.gmra.mrb[0].mxu0 %v302
  %v421 = vpop.f32.mrb[0].mxu0
  %v422 = vadd.f32 %v289, %v421
  %v423 = vpop.f32.mrb[0].mxu0
  %424 = vmatprep.mubr.f32.mxu0 0.0
  %425 = vmatmul.mubr.f32.gmra.mrb[0].mxu0 %v305
  %v426 = vpop.f32.mrb[0].mxu0
  %v427 = vadd.f32 %v289, %v426
  %v428 = vpop.f32.mrb[0].mxu0
  %429 = vmatprep.mubr.f32.mxu0 0.0
  %430 = vmatmul.mubr.f32.gmra.mrb[0].mxu0 %v308
  %v431 = vpop.f32.mrb[0].mxu0
  %v432 = vadd.f32 %v289, %v431
  %v433 = vpop.f32.mrb[0].mxu0
  %434 = vmatprep.mubr.f32.mxu0 0.0
  %435 = vmatmul.mubr.f32.gmra.mrb[0].mxu0 %v311
  %v436 = vpop.f32.mrb[0].mxu0
  %v437 = vadd.f32 %v289, %v436
  %v438 = vpop.f32.mrb[0].mxu0
  %439 = vmatprep.mubr.f32.mxu0 0.0
  %440 = vmatmul.mubr.f32.gmra.mrb[0].mxu0 %v314
  %v441 = vpop.f32.mrb[0].mxu0
  %v442 = vadd.f32 %v289, %v441
  %v443 = vpop.f32.mrb[0].mxu0
  %444 = vmatprep.mubr.f32.mxu0 0.0
  %445 = vmatmul.mubr.f32.gmra.mrb[0].mxu0 %v317
  %v446 = vpop.f32.mrb[0].mxu0
  %v447 = vadd.f32 %v289, %v446
  %v448 = vpop.f32.mrb[0].mxu0
  %449 = vmatprep.mubr.f32.mxu0 0.0
  %450 = vmatmul.mubr.f32.gmra.mrb[0].mxu0 %v320
  %v451 = vpop.f32.mrb[0].mxu0
  %v452 = vadd.f32 %v289, %v451
  %v453 = vpop.f32.mrb[0].mxu0
  %454 = vmatprep.mubr.f32.mxu0 0.0
  %455 = vmatmul.mubr.f32.gmra.mrb[0].mxu0 %v323
  %v456 = vpop.f32.mrb[0].mxu0
  %v457 = vadd.f32 %v289, %v456
  %v458 = vpop.f32.mrb[0].mxu0
  %459 = vmatprep.mubr.f32.mxu0 0.0
  %460 = vmatmul.mubr.f32.gmra.mrb[0].mxu0 %v326
  %v461 = vpop.f32.mrb[0].mxu0
  %v462 = vadd.f32 %v289, %v461
  %v463 = vpop.f32.mrb[0].mxu0
  %464 = vmatprep.mubr.f32.mxu0 0.0
  %465 = vmatmul.mubr.f32.gmra.mrb[0].mxu0 %v329
  %v466 = vpop.f32.mrb[0].mxu0
  %v467 = vadd.f32 %v289, %v466
  %v468 = vpop.f32.mrb[0].mxu0
  %469 = vmatprep.mubr.f32.mxu0 0.0
  %470 = vmatmul.mubr.f32.gmra.mrb[0].mxu0 %v332
  %v471 = vpop.f32.mrb[0].mxu0
  %v472 = vadd.f32 %v289, %v471
  %v473 = vpop.f32.mrb[0].mxu0
  %474 = vmatprep.mubr.f32.mxu0 0.0
  %475 = vmatmul.mubr.f32.gmra.mrb[0].mxu0 %v335
  %v476 = vpop.f32.mrb[0].mxu0
  %v477 = vadd.f32 %v289, %v476
  %v478 = vpop.f32.mrb[0].mxu0
  %479 = vmatprep.mubr.f32.mxu0 0.0
  %480 = vmatmul.mubr.f32.gmra.mrb[0].mxu0 %v338
  %v481 = vpop.f32.mrb[0].mxu0
  %v482 = vadd.f32 %v289, %v481
  %v483 = vpop.f32.mrb[0].mxu0
  %484 = vdwg.mxu0
  %vm485 = vcmask 15360
  %486 = vst.msk [vmem:[%s5] sm:$0xff] %vm485, %v407
  %487 = vst.msk [vmem:[%s5 + $0x8] sm:$0xff] %vm485, %v412
  %488 = vst.msk [vmem:[%s5 + $0x10] sm:$0xff] %vm485, %v417
  %489 = vst.msk [vmem:[%s5 + $0x18] sm:$0xff] %vm485, %v422
  %490 = vst.msk [vmem:[%s5 + $0x20] sm:$0xff] %vm485, %v427
  %491 = vst.msk [vmem:[%s5 + $0x28] sm:$0xff] %vm485, %v432
  %492 = vst.msk [vmem:[%s5 + $0x30] sm:$0xff] %vm485, %v437
  %493 = vst.msk [vmem:[%s5 + $0x38] sm:$0xff] %vm485, %v442
  %494 = vst.msk [vmem:[%s5 + $0x40] sm:$0xff] %vm485, %v447
  %495 = vst.msk [vmem:[%s5 + $0x48] sm:$0xff] %vm485, %v452
  %496 = vst.msk [vmem:[%s5 + $0x50] sm:$0xff] %vm485, %v457
  %497 = vst.msk [vmem:[%s5 + $0x58] sm:$0xff] %vm485, %v462
  %498 = vst.msk [vmem:[%s5 + $0x60] sm:$0xff] %vm485, %v467
  %499 = vst.msk [vmem:[%s5 + $0x68] sm:$0xff] %vm485, %v472
  %500 = vst.msk [vmem:[%s5 + $0x70] sm:$0xff] %vm485, %v477
  %501 = vst.msk [vmem:[%s5 + $0x78] sm:$0xff] %vm485, %v482
  // Predicated region
  $region22: #{free_mlp_generator_forward.1} parent=0 // pred_check
    _
  $region23: #{free_mlp_generator_forward.1} parent=0 // pred_check_branch
    %503 = sbr.rel (0) target = $region25
  $region24: #{free_mlp_generator_forward.1} parent=0 // pred_region
    _
  $region25: #{free_mlp_generator_forward.1} parent=0 // pred_fallthru
    _
  // Predicated region
  $region26: #{free_mlp_generator_forward.1} parent=0 // pred_check
    _
  $region27: #{free_mlp_generator_forward.1} parent=0 // pred_check_branch
    %505 = sbr.rel (0) target = $region29
  $region28: #{free_mlp_generator_forward.1} parent=0 // pred_region
    _
  $region29: #{free_mlp_generator_forward.1} parent=0 // pred_fallthru
    _

</llo_original>
